<compile_context>
chip_gen: v7x
topology: tpu7x:2x2x1
jax: 0.10.0
libtpu: 0.0.40
codegen_flags: <defaults>
</compile_context>

<pallas_src>
import functools
import math

import jax
import jax.numpy as jnp
from jax.experimental import pallas as pl
from jax.experimental.pallas import tpu as pltpu


def _gather_rows_kernel(ids_ref, w_hbm_ref, o_ref, copy_sems, *, token_block):
    """Gather `token_block` embedding rows from the HBM table via DMA.

    ids_ref:    (n_pad,) int32 token ids (SMEM, scalar-prefetched)
    w_hbm_ref:  (V, E)   embedding table, left in HBM (memory_space=pl.ANY)
    o_ref:      (token_block, E) output tile (VMEM)
    copy_sems:  (token_block,) DMA completion semaphores
    """
    base = pl.program_id(0) * token_block

    # Issue all row copies first so the DMA engine can overlap them ...
    for t in range(token_block):
        row = ids_ref[base + t]
        pltpu.make_async_copy(
            w_hbm_ref.at[pl.ds(row, 1), :],
            o_ref.at[pl.ds(t, 1), :],
            copy_sems.at[t],
        ).start()

    # ... then wait for all of them before the tile is handed back to the
    # pipeline for write-back to HBM.
    for t in range(token_block):
        pltpu.make_async_copy(
            w_hbm_ref.at[pl.ds(0, 1), :],   # shape-only; wait consumes the sem
            o_ref.at[pl.ds(t, 1), :],
            copy_sems.at[t],
        ).wait()


def _gather_flat(flat_ids, table, *, token_block):
    """flat_ids: [N] int32, table: [V, E] -> [N, E] gathered rows."""
    n = flat_ids.shape[0]
    V, E = table.shape

    # PyTorch nn.Embedding raises on out-of-range ids; here we clamp so the
    # DMA gather can never read out of bounds.
    # TODO(synk): no runtime error for out-of-range ids (clamped instead).
    flat_ids = jnp.clip(flat_ids.astype(jnp.int32), 0, V - 1)

    n_pad = pl.cdiv(n, token_block) * token_block
    if n_pad != n:
        # pad with index 0 (the padding row, which is all zeros)
        flat_ids = jnp.pad(flat_ids, (0, n_pad - n))

    grid = (n_pad // token_block,)
    out = pl.pallas_call(
        functools.partial(_gather_rows_kernel, token_block=token_block),
        out_shape=jax.ShapeDtypeStruct((n_pad, E), table.dtype),
        grid_spec=pltpu.PrefetchScalarGridSpec(
            num_scalar_prefetch=1,                      # flat_ids -> SMEM
            grid=grid,
            in_specs=[pl.BlockSpec(memory_space=pl.ANY)],  # table stays in HBM
            out_specs=pl.BlockSpec((token_block, E), lambda i, ids: (i, 0)),
            scratch_shapes=[pltpu.SemaphoreType.DMA((token_block,))],
        ),
        compiler_params=pltpu.CompilerParams(
            dimension_semantics=("parallel",),          # independent blocks
        ),
    )(flat_ids, table)

    return out[:n]


def embedding_lookup(ids_list, table, *, token_block=16):
    """Fused lookup: list of [B, T] int32 arrays -> list of [B, T, E]."""
    shapes = [tuple(x.shape) for x in ids_list]
    sizes = [math.prod(s) for s in shapes]
    E = table.shape[1]

    flat = jnp.concatenate([x.reshape(-1).astype(jnp.int32) for x in ids_list])
    gathered = _gather_flat(flat, table, token_block=token_block)

    outs, off = [], 0
    for s, sz in zip(shapes, sizes):
        outs.append(gathered[off:off + sz].reshape(s + (E,)))
        off += sz
    return outs


class TorchEmbeddingPallas:
    """JAX/Pallas port of TorchEmbedding (nn.Embedding with padding_idx=0)."""

    def __init__(self, embedding_size, num_embeddings, key):
        w = jax.random.normal(key, (num_embeddings, embedding_size), jnp.float32)
        # padding_idx=0: row 0 is initialized to zeros
        self.weight = w.at[0].set(0.0)
        # TODO(synk): gradient masking for padding row 0 not implemented
        # (forward/inference only, matching the requested semantics).

    def forward(self, str2var):
        keys = [k for k in ("input", "support") if k in str2var]
        if not keys:
            return []
        # Single fused pallas_call for all requested lookups.
        return embedding_lookup([str2var[k] for k in keys], self.weight)


if __name__ == "__main__":
    key = jax.random.PRNGKey(0)
    k_w, k_in, k_sup = jax.random.split(key, 3)

    num_embeddings = 32
    embedding_size = 32
    batch, timesteps = 2, 8

    model = TorchEmbeddingPallas(embedding_size, num_embeddings, k_w)

    input_ids = jax.random.randint(
        k_in, (batch, timesteps), 0, num_embeddings, jnp.int32)
    support_ids = jax.random.randint(
        k_sup, (batch, timesteps), 0, num_embeddings, jnp.int32)

    str2var = {"input": input_ids, "support": support_ids}
    outs = model.forward(str2var)
    outs = [jax.block_until_ready(o) for o in outs]

    # correctness check vs. plain JAX gather
    refs = [jnp.take(model.weight, input_ids, axis=0),
            jnp.take(model.weight, support_ids, axis=0)]
    for o, r in zip(outs, refs):
        assert o.shape == (batch, timesteps, embedding_size), o.shape
        assert jnp.allclose(o, r, atol=1e-6), "mismatch vs reference gather"

    print("KERNEL_OK")
</pallas_src>

<mosaic_0001>
module attributes {stable_mosaic.version = 11 : i64} {
  func.func @_gather_rows_kernel(%arg0: i32, %arg1: memref<32xi32, #tpu.memory_space<smem>>, %arg2: memref<32x32xf32, #tpu.memory_space<any>>, %arg3: memref<16x32xf32, #tpu.memory_space<vmem>>, %arg4: memref<16x!tpu.dma_semaphore, #tpu.memory_space<semaphore_mem>>) attributes {dimension_semantics = [#tpu.dimension_semantics<parallel>], iteration_bounds = array<i64: 2>, scalar_prefetch = 1 : i64, scratch_operands = 1 : i64, tpu.core_type = #tpu.core_type<tc>, window_params = [{}, {transform_indices = @transform_1, window_bounds = array<i64: 16, 32>}]} {
    %c16_i32 = arith.constant 16 : i32
    %0 = arith.muli %arg0, %c16_i32 : i32
    %c0_i32 = arith.constant 0 : i32
    %1 = arith.addi %0, %c0_i32 : i32
    %2 = arith.index_cast %1 : i32 to index
    %3 = memref.load %arg1[%2] : memref<32xi32, #tpu.memory_space<smem>>
    %c0_i32_0 = arith.constant 0 : i32
    %c0_i32_1 = arith.constant 0 : i32
    %4 = tpu.memref_slice %arg2[%3, %c0_i32_1] : memref<32x32xf32, #tpu.memory_space<any>> -> memref<1x32xf32, #tpu.memory_space<any>>
    %c0_i32_2 = arith.constant 0 : i32
    %c0_i32_3 = arith.constant 0 : i32
    %5 = tpu.memref_slice %arg3[%c0_i32_2, %c0_i32_3] : memref<16x32xf32, #tpu.memory_space<vmem>> -> memref<1x32xf32, #tpu.memory_space<vmem>>
    %6 = tpu.memref_slice %arg4[%c0_i32_0] : memref<16x!tpu.dma_semaphore, #tpu.memory_space<semaphore_mem>> -> memref<1x!tpu.dma_semaphore, #tpu.memory_space<semaphore_mem>>
    %7 = tpu.memref_squeeze %6 : memref<1x!tpu.dma_semaphore, #tpu.memory_space<semaphore_mem>> -> memref<!tpu.dma_semaphore, #tpu.memory_space<semaphore_mem>>
    tpu.enqueue_dma source(%4 : memref<1x32xf32, #tpu.memory_space<any>>) target(%5 : memref<1x32xf32, #tpu.memory_space<vmem>>) target_semaphore(%7 : memref<!tpu.dma_semaphore, #tpu.memory_space<semaphore_mem>>)
    %c1_i32 = arith.constant 1 : i32
    %8 = arith.addi %0, %c1_i32 : i32
    %9 = arith.index_cast %8 : i32 to index
    %10 = memref.load %arg1[%9] : memref<32xi32, #tpu.memory_space<smem>>
    %c1_i32_4 = arith.constant 1 : i32
    %c0_i32_5 = arith.constant 0 : i32
    %11 = tpu.memref_slice %arg2[%10, %c0_i32_5] : memref<32x32xf32, #tpu.memory_space<any>> -> memref<1x32xf32, #tpu.memory_space<any>>
    %c1_i32_6 = arith.constant 1 : i32
    %c0_i32_7 = arith.constant 0 : i32
    %12 = tpu.memref_slice %arg3[%c1_i32_6, %c0_i32_7] : memref<16x32xf32, #tpu.memory_space<vmem>> -> memref<1x32xf32, #tpu.memory_space<vmem>>
    %13 = tpu.memref_slice %arg4[%c1_i32_4] : memref<16x!tpu.dma_semaphore, #tpu.memory_space<semaphore_mem>> -> memref<1x!tpu.dma_semaphore, #tpu.memory_space<semaphore_mem>>
    %14 = tpu.memref_squeeze %13 : memref<1x!tpu.dma_semaphore, #tpu.memory_space<semaphore_mem>> -> memref<!tpu.dma_semaphore, #tpu.memory_space<semaphore_mem>>
    tpu.enqueue_dma source(%11 : memref<1x32xf32, #tpu.memory_space<any>>) target(%12 : memref<1x32xf32, #tpu.memory_space<vmem>>) target_semaphore(%14 : memref<!tpu.dma_semaphore, #tpu.memory_space<semaphore_mem>>)
    %c2_i32 = arith.constant 2 : i32
    %15 = arith.addi %0, %c2_i32 : i32
    %16 = arith.index_cast %15 : i32 to index
    %17 = memref.load %arg1[%16] : memref<32xi32, #tpu.memory_space<smem>>
    %c2_i32_8 = arith.constant 2 : i32
    %c0_i32_9 = arith.constant 0 : i32
    %18 = tpu.memref_slice %arg2[%17, %c0_i32_9] : memref<32x32xf32, #tpu.memory_space<any>> -> memref<1x32xf32, #tpu.memory_space<any>>
    %c2_i32_10 = arith.constant 2 : i32
    %c0_i32_11 = arith.constant 0 : i32
    %19 = tpu.memref_slice %arg3[%c2_i32_10, %c0_i32_11] : memref<16x32xf32, #tpu.memory_space<vmem>> -> memref<1x32xf32, #tpu.memory_space<vmem>>
    %20 = tpu.memref_slice %arg4[%c2_i32_8] : memref<16x!tpu.dma_semaphore, #tpu.memory_space<semaphore_mem>> -> memref<1x!tpu.dma_semaphore, #tpu.memory_space<semaphore_mem>>
    %21 = tpu.memref_squeeze %20 : memref<1x!tpu.dma_semaphore, #tpu.memory_space<semaphore_mem>> -> memref<!tpu.dma_semaphore, #tpu.memory_space<semaphore_mem>>
    tpu.enqueue_dma source(%18 : memref<1x32xf32, #tpu.memory_space<any>>) target(%19 : memref<1x32xf32, #tpu.memory_space<vmem>>) target_semaphore(%21 : memref<!tpu.dma_semaphore, #tpu.memory_space<semaphore_mem>>)
    %c3_i32 = arith.constant 3 : i32
    %22 = arith.addi %0, %c3_i32 : i32
    %23 = arith.index_cast %22 : i32 to index
    %24 = memref.load %arg1[%23] : memref<32xi32, #tpu.memory_space<smem>>
    %c3_i32_12 = arith.constant 3 : i32
    %c0_i32_13 = arith.constant 0 : i32
    %25 = tpu.memref_slice %arg2[%24, %c0_i32_13] : memref<32x32xf32, #tpu.memory_space<any>> -> memref<1x32xf32, #tpu.memory_space<any>>
    %c3_i32_14 = arith.constant 3 : i32
    %c0_i32_15 = arith.constant 0 : i32
    %26 = tpu.memref_slice %arg3[%c3_i32_14, %c0_i32_15] : memref<16x32xf32, #tpu.memory_space<vmem>> -> memref<1x32xf32, #tpu.memory_space<vmem>>
    %27 = tpu.memref_slice %arg4[%c3_i32_12] : memref<16x!tpu.dma_semaphore, #tpu.memory_space<semaphore_mem>> -> memref<1x!tpu.dma_semaphore, #tpu.memory_space<semaphore_mem>>
    %28 = tpu.memref_squeeze %27 : memref<1x!tpu.dma_semaphore, #tpu.memory_space<semaphore_mem>> -> memref<!tpu.dma_semaphore, #tpu.memory_space<semaphore_mem>>
    tpu.enqueue_dma source(%25 : memref<1x32xf32, #tpu.memory_space<any>>) target(%26 : memref<1x32xf32, #tpu.memory_space<vmem>>) target_semaphore(%28 : memref<!tpu.dma_semaphore, #tpu.memory_space<semaphore_mem>>)
    %c4_i32 = arith.constant 4 : i32
    %29 = arith.addi %0, %c4_i32 : i32
    %30 = arith.index_cast %29 : i32 to index
    %31 = memref.load %arg1[%30] : memref<32xi32, #tpu.memory_space<smem>>
    %c4_i32_16 = arith.constant 4 : i32
    %c0_i32_17 = arith.constant 0 : i32
    %32 = tpu.memref_slice %arg2[%31, %c0_i32_17] : memref<32x32xf32, #tpu.memory_space<any>> -> memref<1x32xf32, #tpu.memory_space<any>>
    %c4_i32_18 = arith.constant 4 : i32
    %c0_i32_19 = arith.constant 0 : i32
    %33 = tpu.memref_slice %arg3[%c4_i32_18, %c0_i32_19] : memref<16x32xf32, #tpu.memory_space<vmem>> -> memref<1x32xf32, #tpu.memory_space<vmem>>
    %34 = tpu.memref_slice %arg4[%c4_i32_16] : memref<16x!tpu.dma_semaphore, #tpu.memory_space<semaphore_mem>> -> memref<1x!tpu.dma_semaphore, #tpu.memory_space<semaphore_mem>>
    %35 = tpu.memref_squeeze %34 : memref<1x!tpu.dma_semaphore, #tpu.memory_space<semaphore_mem>> -> memref<!tpu.dma_semaphore, #tpu.memory_space<semaphore_mem>>
    tpu.enqueue_dma source(%32 : memref<1x32xf32, #tpu.memory_space<any>>) target(%33 : memref<1x32xf32, #tpu.memory_space<vmem>>) target_semaphore(%35 : memref<!tpu.dma_semaphore, #tpu.memory_space<semaphore_mem>>)
    %c5_i32 = arith.constant 5 : i32
    %36 = arith.addi %0, %c5_i32 : i32
    %37 = arith.index_cast %36 : i32 to index
    %38 = memref.load %arg1[%37] : memref<32xi32, #tpu.memory_space<smem>>
    %c5_i32_20 = arith.constant 5 : i32
    %c0_i32_21 = arith.constant 0 : i32
    %39 = tpu.memref_slice %arg2[%38, %c0_i32_21] : memref<32x32xf32, #tpu.memory_space<any>> -> memref<1x32xf32, #tpu.memory_space<any>>
    %c5_i32_22 = arith.constant 5 : i32
    %c0_i32_23 = arith.constant 0 : i32
    %40 = tpu.memref_slice %arg3[%c5_i32_22, %c0_i32_23] : memref<16x32xf32, #tpu.memory_space<vmem>> -> memref<1x32xf32, #tpu.memory_space<vmem>>
    %41 = tpu.memref_slice %arg4[%c5_i32_20] : memref<16x!tpu.dma_semaphore, #tpu.memory_space<semaphore_mem>> -> memref<1x!tpu.dma_semaphore, #tpu.memory_space<semaphore_mem>>
    %42 = tpu.memref_squeeze %41 : memref<1x!tpu.dma_semaphore, #tpu.memory_space<semaphore_mem>> -> memref<!tpu.dma_semaphore, #tpu.memory_space<semaphore_mem>>
    tpu.enqueue_dma source(%39 : memref<1x32xf32, #tpu.memory_space<any>>) target(%40 : memref<1x32xf32, #tpu.memory_space<vmem>>) target_semaphore(%42 : memref<!tpu.dma_semaphore, #tpu.memory_space<semaphore_mem>>)
    %c6_i32 = arith.constant 6 : i32
    %43 = arith.addi %0, %c6_i32 : i32
    %44 = arith.index_cast %43 : i32 to index
    %45 = memref.load %arg1[%44] : memref<32xi32, #tpu.memory_space<smem>>
    %c6_i32_24 = arith.constant 6 : i32
    %c0_i32_25 = arith.constant 0 : i32
    %46 = tpu.memref_slice %arg2[%45, %c0_i32_25] : memref<32x32xf32, #tpu.memory_space<any>> -> memref<1x32xf32, #tpu.memory_space<any>>
    %c6_i32_26 = arith.constant 6 : i32
    %c0_i32_27 = arith.constant 0 : i32
    %47 = tpu.memref_slice %arg3[%c6_i32_26, %c0_i32_27] : memref<16x32xf32, #tpu.memory_space<vmem>> -> memref<1x32xf32, #tpu.memory_space<vmem>>
    %48 = tpu.memref_slice %arg4[%c6_i32_24] : memref<16x!tpu.dma_semaphore, #tpu.memory_space<semaphore_mem>> -> memref<1x!tpu.dma_semaphore, #tpu.memory_space<semaphore_mem>>
    %49 = tpu.memref_squeeze %48 : memref<1x!tpu.dma_semaphore, #tpu.memory_space<semaphore_mem>> -> memref<!tpu.dma_semaphore, #tpu.memory_space<semaphore_mem>>
    tpu.enqueue_dma source(%46 : memref<1x32xf32, #tpu.memory_space<any>>) target(%47 : memref<1x32xf32, #tpu.memory_space<vmem>>) target_semaphore(%49 : memref<!tpu.dma_semaphore, #tpu.memory_space<semaphore_mem>>)
    %c7_i32 = arith.constant 7 : i32
    %50 = arith.addi %0, %c7_i32 : i32
    %51 = arith.index_cast %50 : i32 to index
    %52 = memref.load %arg1[%51] : memref<32xi32, #tpu.memory_space<smem>>
    %c7_i32_28 = arith.constant 7 : i32
    %c0_i32_29 = arith.constant 0 : i32
    %53 = tpu.memref_slice %arg2[%52, %c0_i32_29] : memref<32x32xf32, #tpu.memory_space<any>> -> memref<1x32xf32, #tpu.memory_space<any>>
    %c7_i32_30 = arith.constant 7 : i32
    %c0_i32_31 = arith.constant 0 : i32
    %54 = tpu.memref_slice %arg3[%c7_i32_30, %c0_i32_31] : memref<16x32xf32, #tpu.memory_space<vmem>> -> memref<1x32xf32, #tpu.memory_space<vmem>>
    %55 = tpu.memref_slice %arg4[%c7_i32_28] : memref<16x!tpu.dma_semaphore, #tpu.memory_space<semaphore_mem>> -> memref<1x!tpu.dma_semaphore, #tpu.memory_space<semaphore_mem>>
    %56 = tpu.memref_squeeze %55 : memref<1x!tpu.dma_semaphore, #tpu.memory_space<semaphore_mem>> -> memref<!tpu.dma_semaphore, #tpu.memory_space<semaphore_mem>>
    tpu.enqueue_dma source(%53 : memref<1x32xf32, #tpu.memory_space<any>>) target(%54 : memref<1x32xf32, #tpu.memory_space<vmem>>) target_semaphore(%56 : memref<!tpu.dma_semaphore, #tpu.memory_space<semaphore_mem>>)
    %c8_i32 = arith.constant 8 : i32
    %57 = arith.addi %0, %c8_i32 : i32
    %58 = arith.index_cast %57 : i32 to index
    %59 = memref.load %arg1[%58] : memref<32xi32, #tpu.memory_space<smem>>
    %c8_i32_32 = arith.constant 8 : i32
    %c0_i32_33 = arith.constant 0 : i32
    %60 = tpu.memref_slice %arg2[%59, %c0_i32_33] : memref<32x32xf32, #tpu.memory_space<any>> -> memref<1x32xf32, #tpu.memory_space<any>>
    %c8_i32_34 = arith.constant 8 : i32
    %c0_i32_35 = arith.constant 0 : i32
    %61 = tpu.memref_slice %arg3[%c8_i32_34, %c0_i32_35] : memref<16x32xf32, #tpu.memory_space<vmem>> -> memref<1x32xf32, #tpu.memory_space<vmem>>
    %62 = tpu.memref_slice %arg4[%c8_i32_32] : memref<16x!tpu.dma_semaphore, #tpu.memory_space<semaphore_mem>> -> memref<1x!tpu.dma_semaphore, #tpu.memory_space<semaphore_mem>>
    %63 = tpu.memref_squeeze %62 : memref<1x!tpu.dma_semaphore, #tpu.memory_space<semaphore_mem>> -> memref<!tpu.dma_semaphore, #tpu.memory_space<semaphore_mem>>
    tpu.enqueue_dma source(%60 : memref<1x32xf32, #tpu.memory_space<any>>) target(%61 : memref<1x32xf32, #tpu.memory_space<vmem>>) target_semaphore(%63 : memref<!tpu.dma_semaphore, #tpu.memory_space<semaphore_mem>>)
    %c9_i32 = arith.constant 9 : i32
    %64 = arith.addi %0, %c9_i32 : i32
    %65 = arith.index_cast %64 : i32 to index
    %66 = memref.load %arg1[%65] : memref<32xi32, #tpu.memory_space<smem>>
    %c9_i32_36 = arith.constant 9 : i32
    %c0_i32_37 = arith.constant 0 : i32
    %67 = tpu.memref_slice %arg2[%66, %c0_i32_37] : memref<32x32xf32, #tpu.memory_space<any>> -> memref<1x32xf32, #tpu.memory_space<any>>
    %c9_i32_38 = arith.constant 9 : i32
    %c0_i32_39 = arith.constant 0 : i32
    %68 = tpu.memref_slice %arg3[%c9_i32_38, %c0_i32_39] : memref<16x32xf32, #tpu.memory_space<vmem>> -> memref<1x32xf32, #tpu.memory_space<vmem>>
    %69 = tpu.memref_slice %arg4[%c9_i32_36] : memref<16x!tpu.dma_semaphore, #tpu.memory_space<semaphore_mem>> -> memref<1x!tpu.dma_semaphore, #tpu.memory_space<semaphore_mem>>
    %70 = tpu.memref_squeeze %69 : memref<1x!tpu.dma_semaphore, #tpu.memory_space<semaphore_mem>> -> memref<!tpu.dma_semaphore, #tpu.memory_space<semaphore_mem>>
    tpu.enqueue_dma source(%67 : memref<1x32xf32, #tpu.memory_space<any>>) target(%68 : memref<1x32xf32, #tpu.memory_space<vmem>>) target_semaphore(%70 : memref<!tpu.dma_semaphore, #tpu.memory_space<semaphore_mem>>)
    %c10_i32 = arith.constant 10 : i32
    %71 = arith.addi %0, %c10_i32 : i32
    %72 = arith.index_cast %71 : i32 to index
    %73 = memref.load %arg1[%72] : memref<32xi32, #tpu.memory_space<smem>>
    %c10_i32_40 = arith.constant 10 : i32
    %c0_i32_41 = arith.constant 0 : i32
    %74 = tpu.memref_slice %arg2[%73, %c0_i32_41] : memref<32x32xf32, #tpu.memory_space<any>> -> memref<1x32xf32, #tpu.memory_space<any>>
    %c10_i32_42 = arith.constant 10 : i32
    %c0_i32_43 = arith.constant 0 : i32
    %75 = tpu.memref_slice %arg3[%c10_i32_42, %c0_i32_43] : memref<16x32xf32, #tpu.memory_space<vmem>> -> memref<1x32xf32, #tpu.memory_space<vmem>>
    %76 = tpu.memref_slice %arg4[%c10_i32_40] : memref<16x!tpu.dma_semaphore, #tpu.memory_space<semaphore_mem>> -> memref<1x!tpu.dma_semaphore, #tpu.memory_space<semaphore_mem>>
    %77 = tpu.memref_squeeze %76 : memref<1x!tpu.dma_semaphore, #tpu.memory_space<semaphore_mem>> -> memref<!tpu.dma_semaphore, #tpu.memory_space<semaphore_mem>>
    tpu.enqueue_dma source(%74 : memref<1x32xf32, #tpu.memory_space<any>>) target(%75 : memref<1x32xf32, #tpu.memory_space<vmem>>) target_semaphore(%77 : memref<!tpu.dma_semaphore, #tpu.memory_space<semaphore_mem>>)
    %c11_i32 = arith.constant 11 : i32
    %78 = arith.addi %0, %c11_i32 : i32
    %79 = arith.index_cast %78 : i32 to index
    %80 = memref.load %arg1[%79] : memref<32xi32, #tpu.memory_space<smem>>
    %c11_i32_44 = arith.constant 11 : i32
    %c0_i32_45 = arith.constant 0 : i32
    %81 = tpu.memref_slice %arg2[%80, %c0_i32_45] : memref<32x32xf32, #tpu.memory_space<any>> -> memref<1x32xf32, #tpu.memory_space<any>>
    %c11_i32_46 = arith.constant 11 : i32
    %c0_i32_47 = arith.constant 0 : i32
    %82 = tpu.memref_slice %arg3[%c11_i32_46, %c0_i32_47] : memref<16x32xf32, #tpu.memory_space<vmem>> -> memref<1x32xf32, #tpu.memory_space<vmem>>
    %83 = tpu.memref_slice %arg4[%c11_i32_44] : memref<16x!tpu.dma_semaphore, #tpu.memory_space<semaphore_mem>> -> memref<1x!tpu.dma_semaphore, #tpu.memory_space<semaphore_mem>>
    %84 = tpu.memref_squeeze %83 : memref<1x!tpu.dma_semaphore, #tpu.memory_space<semaphore_mem>> -> memref<!tpu.dma_semaphore, #tpu.memory_space<semaphore_mem>>
    tpu.enqueue_dma source(%81 : memref<1x32xf32, #tpu.memory_space<any>>) target(%82 : memref<1x32xf32, #tpu.memory_space<vmem>>) target_semaphore(%84 : memref<!tpu.dma_semaphore, #tpu.memory_space<semaphore_mem>>)
    %c12_i32 = arith.constant 12 : i32
    %85 = arith.addi %0, %c12_i32 : i32
    %86 = arith.index_cast %85 : i32 to index
    %87 = memref.load %arg1[%86] : memref<32xi32, #tpu.memory_space<smem>>
    %c12_i32_48 = arith.constant 12 : i32
    %c0_i32_49 = arith.constant 0 : i32
    %88 = tpu.memref_slice %arg2[%87, %c0_i32_49] : memref<32x32xf32, #tpu.memory_space<any>> -> memref<1x32xf32, #tpu.memory_space<any>>
    %c12_i32_50 = arith.constant 12 : i32
    %c0_i32_51 = arith.constant 0 : i32
    %89 = tpu.memref_slice %arg3[%c12_i32_50, %c0_i32_51] : memref<16x32xf32, #tpu.memory_space<vmem>> -> memref<1x32xf32, #tpu.memory_space<vmem>>
    %90 = tpu.memref_slice %arg4[%c12_i32_48] : memref<16x!tpu.dma_semaphore, #tpu.memory_space<semaphore_mem>> -> memref<1x!tpu.dma_semaphore, #tpu.memory_space<semaphore_mem>>
    %91 = tpu.memref_squeeze %90 : memref<1x!tpu.dma_semaphore, #tpu.memory_space<semaphore_mem>> -> memref<!tpu.dma_semaphore, #tpu.memory_space<semaphore_mem>>
    tpu.enqueue_dma source(%88 : memref<1x32xf32, #tpu.memory_space<any>>) target(%89 : memref<1x32xf32, #tpu.memory_space<vmem>>) target_semaphore(%91 : memref<!tpu.dma_semaphore, #tpu.memory_space<semaphore_mem>>)
    %c13_i32 = arith.constant 13 : i32
    %92 = arith.addi %0, %c13_i32 : i32
    %93 = arith.index_cast %92 : i32 to index
    %94 = memref.load %arg1[%93] : memref<32xi32, #tpu.memory_space<smem>>
    %c13_i32_52 = arith.constant 13 : i32
    %c0_i32_53 = arith.constant 0 : i32
    %95 = tpu.memref_slice %arg2[%94, %c0_i32_53] : memref<32x32xf32, #tpu.memory_space<any>> -> memref<1x32xf32, #tpu.memory_space<any>>
    %c13_i32_54 = arith.constant 13 : i32
    %c0_i32_55 = arith.constant 0 : i32
    %96 = tpu.memref_slice %arg3[%c13_i32_54, %c0_i32_55] : memref<16x32xf32, #tpu.memory_space<vmem>> -> memref<1x32xf32, #tpu.memory_space<vmem>>
    %97 = tpu.memref_slice %arg4[%c13_i32_52] : memref<16x!tpu.dma_semaphore, #tpu.memory_space<semaphore_mem>> -> memref<1x!tpu.dma_semaphore, #tpu.memory_space<semaphore_mem>>
    %98 = tpu.memref_squeeze %97 : memref<1x!tpu.dma_semaphore, #tpu.memory_space<semaphore_mem>> -> memref<!tpu.dma_semaphore, #tpu.memory_space<semaphore_mem>>
    tpu.enqueue_dma source(%95 : memref<1x32xf32, #tpu.memory_space<any>>) target(%96 : memref<1x32xf32, #tpu.memory_space<vmem>>) target_semaphore(%98 : memref<!tpu.dma_semaphore, #tpu.memory_space<semaphore_mem>>)
    %c14_i32 = arith.constant 14 : i32
    %99 = arith.addi %0, %c14_i32 : i32
    %100 = arith.index_cast %99 : i32 to index
    %101 = memref.load %arg1[%100] : memref<32xi32, #tpu.memory_space<smem>>
    %c14_i32_56 = arith.constant 14 : i32
    %c0_i32_57 = arith.constant 0 : i32
    %102 = tpu.memref_slice %arg2[%101, %c0_i32_57] : memref<32x32xf32, #tpu.memory_space<any>> -> memref<1x32xf32, #tpu.memory_space<any>>
    %c14_i32_58 = arith.constant 14 : i32
    %c0_i32_59 = arith.constant 0 : i32
    %103 = tpu.memref_slice %arg3[%c14_i32_58, %c0_i32_59] : memref<16x32xf32, #tpu.memory_space<vmem>> -> memref<1x32xf32, #tpu.memory_space<vmem>>
    %104 = tpu.memref_slice %arg4[%c14_i32_56] : memref<16x!tpu.dma_semaphore, #tpu.memory_space<semaphore_mem>> -> memref<1x!tpu.dma_semaphore, #tpu.memory_space<semaphore_mem>>
    %105 = tpu.memref_squeeze %104 : memref<1x!tpu.dma_semaphore, #tpu.memory_space<semaphore_mem>> -> memref<!tpu.dma_semaphore, #tpu.memory_space<semaphore_mem>>
    tpu.enqueue_dma source(%102 : memref<1x32xf32, #tpu.memory_space<any>>) target(%103 : memref<1x32xf32, #tpu.memory_space<vmem>>) target_semaphore(%105 : memref<!tpu.dma_semaphore, #tpu.memory_space<semaphore_mem>>)
    %c15_i32 = arith.constant 15 : i32
    %106 = arith.addi %0, %c15_i32 : i32
    %107 = arith.index_cast %106 : i32 to index
    %108 = memref.load %arg1[%107] : memref<32xi32, #tpu.memory_space<smem>>
    %c15_i32_60 = arith.constant 15 : i32
    %c0_i32_61 = arith.constant 0 : i32
    %109 = tpu.memref_slice %arg2[%108, %c0_i32_61] : memref<32x32xf32, #tpu.memory_space<any>> -> memref<1x32xf32, #tpu.memory_space<any>>
    %c15_i32_62 = arith.constant 15 : i32
    %c0_i32_63 = arith.constant 0 : i32
    %110 = tpu.memref_slice %arg3[%c15_i32_62, %c0_i32_63] : memref<16x32xf32, #tpu.memory_space<vmem>> -> memref<1x32xf32, #tpu.memory_space<vmem>>
    %111 = tpu.memref_slice %arg4[%c15_i32_60] : memref<16x!tpu.dma_semaphore, #tpu.memory_space<semaphore_mem>> -> memref<1x!tpu.dma_semaphore, #tpu.memory_space<semaphore_mem>>
    %112 = tpu.memref_squeeze %111 : memref<1x!tpu.dma_semaphore, #tpu.memory_space<semaphore_mem>> -> memref<!tpu.dma_semaphore, #tpu.memory_space<semaphore_mem>>
    tpu.enqueue_dma source(%109 : memref<1x32xf32, #tpu.memory_space<any>>) target(%110 : memref<1x32xf32, #tpu.memory_space<vmem>>) target_semaphore(%112 : memref<!tpu.dma_semaphore, #tpu.memory_space<semaphore_mem>>)
    %c0_i32_64 = arith.constant 0 : i32
    %c0_i32_65 = arith.constant 0 : i32
    %c0_i32_66 = arith.constant 0 : i32
    %113 = tpu.memref_slice %arg2[%c0_i32_65, %c0_i32_66] : memref<32x32xf32, #tpu.memory_space<any>> -> memref<1x32xf32, #tpu.memory_space<any>>
    %c0_i32_67 = arith.constant 0 : i32
    %c0_i32_68 = arith.constant 0 : i32
    %114 = tpu.memref_slice %arg3[%c0_i32_67, %c0_i32_68] : memref<16x32xf32, #tpu.memory_space<vmem>> -> memref<1x32xf32, #tpu.memory_space<vmem>>
    %115 = tpu.memref_slice %arg4[%c0_i32_64] : memref<16x!tpu.dma_semaphore, #tpu.memory_space<semaphore_mem>> -> memref<1x!tpu.dma_semaphore, #tpu.memory_space<semaphore_mem>>
    %116 = tpu.memref_squeeze %115 : memref<1x!tpu.dma_semaphore, #tpu.memory_space<semaphore_mem>> -> memref<!tpu.dma_semaphore, #tpu.memory_space<semaphore_mem>>
    tpu.wait_dma2 semaphore(%116 : memref<!tpu.dma_semaphore, #tpu.memory_space<semaphore_mem>>) src(%113 : memref<1x32xf32, #tpu.memory_space<any>>) dst(%114 : memref<1x32xf32, #tpu.memory_space<vmem>>)
    %c1_i32_69 = arith.constant 1 : i32
    %c0_i32_70 = arith.constant 0 : i32
    %c0_i32_71 = arith.constant 0 : i32
    %117 = tpu.memref_slice %arg2[%c0_i32_70, %c0_i32_71] : memref<32x32xf32, #tpu.memory_space<any>> -> memref<1x32xf32, #tpu.memory_space<any>>
    %c1_i32_72 = arith.constant 1 : i32
    %c0_i32_73 = arith.constant 0 : i32
    %118 = tpu.memref_slice %arg3[%c1_i32_72, %c0_i32_73] : memref<16x32xf32, #tpu.memory_space<vmem>> -> memref<1x32xf32, #tpu.memory_space<vmem>>
    %119 = tpu.memref_slice %arg4[%c1_i32_69] : memref<16x!tpu.dma_semaphore, #tpu.memory_space<semaphore_mem>> -> memref<1x!tpu.dma_semaphore, #tpu.memory_space<semaphore_mem>>
    %120 = tpu.memref_squeeze %119 : memref<1x!tpu.dma_semaphore, #tpu.memory_space<semaphore_mem>> -> memref<!tpu.dma_semaphore, #tpu.memory_space<semaphore_mem>>
    tpu.wait_dma2 semaphore(%120 : memref<!tpu.dma_semaphore, #tpu.memory_space<semaphore_mem>>) src(%117 : memref<1x32xf32, #tpu.memory_space<any>>) dst(%118 : memref<1x32xf32, #tpu.memory_space<vmem>>)
    %c2_i32_74 = arith.constant 2 : i32
    %c0_i32_75 = arith.constant 0 : i32
    %c0_i32_76 = arith.constant 0 : i32
    %121 = tpu.memref_slice %arg2[%c0_i32_75, %c0_i32_76] : memref<32x32xf32, #tpu.memory_space<any>> -> memref<1x32xf32, #tpu.memory_space<any>>
    %c2_i32_77 = arith.constant 2 : i32
    %c0_i32_78 = arith.constant 0 : i32
    %122 = tpu.memref_slice %arg3[%c2_i32_77, %c0_i32_78] : memref<16x32xf32, #tpu.memory_space<vmem>> -> memref<1x32xf32, #tpu.memory_space<vmem>>
    %123 = tpu.memref_slice %arg4[%c2_i32_74] : memref<16x!tpu.dma_semaphore, #tpu.memory_space<semaphore_mem>> -> memref<1x!tpu.dma_semaphore, #tpu.memory_space<semaphore_mem>>
    %124 = tpu.memref_squeeze %123 : memref<1x!tpu.dma_semaphore, #tpu.memory_space<semaphore_mem>> -> memref<!tpu.dma_semaphore, #tpu.memory_space<semaphore_mem>>
    tpu.wait_dma2 semaphore(%124 : memref<!tpu.dma_semaphore, #tpu.memory_space<semaphore_mem>>) src(%121 : memref<1x32xf32, #tpu.memory_space<any>>) dst(%122 : memref<1x32xf32, #tpu.memory_space<vmem>>)
    %c3_i32_79 = arith.constant 3 : i32
    %c0_i32_80 = arith.constant 0 : i32
    %c0_i32_81 = arith.constant 0 : i32
    %125 = tpu.memref_slice %arg2[%c0_i32_80, %c0_i32_81] : memref<32x32xf32, #tpu.memory_space<any>> -> memref<1x32xf32, #tpu.memory_space<any>>
    %c3_i32_82 = arith.constant 3 : i32
    %c0_i32_83 = arith.constant 0 : i32
    %126 = tpu.memref_slice %arg3[%c3_i32_82, %c0_i32_83] : memref<16x32xf32, #tpu.memory_space<vmem>> -> memref<1x32xf32, #tpu.memory_space<vmem>>
    %127 = tpu.memref_slice %arg4[%c3_i32_79] : memref<16x!tpu.dma_semaphore, #tpu.memory_space<semaphore_mem>> -> memref<1x!tpu.dma_semaphore, #tpu.memory_space<semaphore_mem>>
    %128 = tpu.memref_squeeze %127 : memref<1x!tpu.dma_semaphore, #tpu.memory_space<semaphore_mem>> -> memref<!tpu.dma_semaphore, #tpu.memory_space<semaphore_mem>>
    tpu.wait_dma2 semaphore(%128 : memref<!tpu.dma_semaphore, #tpu.memory_space<semaphore_mem>>) src(%125 : memref<1x32xf32, #tpu.memory_space<any>>) dst(%126 : memref<1x32xf32, #tpu.memory_space<vmem>>)
    %c4_i32_84 = arith.constant 4 : i32
    %c0_i32_85 = arith.constant 0 : i32
    %c0_i32_86 = arith.constant 0 : i32
    %129 = tpu.memref_slice %arg2[%c0_i32_85, %c0_i32_86] : memref<32x32xf32, #tpu.memory_space<any>> -> memref<1x32xf32, #tpu.memory_space<any>>
    %c4_i32_87 = arith.constant 4 : i32
    %c0_i32_88 = arith.constant 0 : i32
    %130 = tpu.memref_slice %arg3[%c4_i32_87, %c0_i32_88] : memref<16x32xf32, #tpu.memory_space<vmem>> -> memref<1x32xf32, #tpu.memory_space<vmem>>
    %131 = tpu.memref_slice %arg4[%c4_i32_84] : memref<16x!tpu.dma_semaphore, #tpu.memory_space<semaphore_mem>> -> memref<1x!tpu.dma_semaphore, #tpu.memory_space<semaphore_mem>>
    %132 = tpu.memref_squeeze %131 : memref<1x!tpu.dma_semaphore, #tpu.memory_space<semaphore_mem>> -> memref<!tpu.dma_semaphore, #tpu.memory_space<semaphore_mem>>
    tpu.wait_dma2 semaphore(%132 : memref<!tpu.dma_semaphore, #tpu.memory_space<semaphore_mem>>) src(%129 : memref<1x32xf32, #tpu.memory_space<any>>) dst(%130 : memref<1x32xf32, #tpu.memory_space<vmem>>)
    %c5_i32_89 = arith.constant 5 : i32
    %c0_i32_90 = arith.constant 0 : i32
    %c0_i32_91 = arith.constant 0 : i32
    %133 = tpu.memref_slice %arg2[%c0_i32_90, %c0_i32_91] : memref<32x32xf32, #tpu.memory_space<any>> -> memref<1x32xf32, #tpu.memory_space<any>>
    %c5_i32_92 = arith.constant 5 : i32
    %c0_i32_93 = arith.constant 0 : i32
    %134 = tpu.memref_slice %arg3[%c5_i32_92, %c0_i32_93] : memref<16x32xf32, #tpu.memory_space<vmem>> -> memref<1x32xf32, #tpu.memory_space<vmem>>
    %135 = tpu.memref_slice %arg4[%c5_i32_89] : memref<16x!tpu.dma_semaphore, #tpu.memory_space<semaphore_mem>> -> memref<1x!tpu.dma_semaphore, #tpu.memory_space<semaphore_mem>>
    %136 = tpu.memref_squeeze %135 : memref<1x!tpu.dma_semaphore, #tpu.memory_space<semaphore_mem>> -> memref<!tpu.dma_semaphore, #tpu.memory_space<semaphore_mem>>
    tpu.wait_dma2 semaphore(%136 : memref<!tpu.dma_semaphore, #tpu.memory_space<semaphore_mem>>) src(%133 : memref<1x32xf32, #tpu.memory_space<any>>) dst(%134 : memref<1x32xf32, #tpu.memory_space<vmem>>)
    %c6_i32_94 = arith.constant 6 : i32
    %c0_i32_95 = arith.constant 0 : i32
    %c0_i32_96 = arith.constant 0 : i32
    %137 = tpu.memref_slice %arg2[%c0_i32_95, %c0_i32_96] : memref<32x32xf32, #tpu.memory_space<any>> -> memref<1x32xf32, #tpu.memory_space<any>>
    %c6_i32_97 = arith.constant 6 : i32
    %c0_i32_98 = arith.constant 0 : i32
    %138 = tpu.memref_slice %arg3[%c6_i32_97, %c0_i32_98] : memref<16x32xf32, #tpu.memory_space<vmem>> -> memref<1x32xf32, #tpu.memory_space<vmem>>
    %139 = tpu.memref_slice %arg4[%c6_i32_94] : memref<16x!tpu.dma_semaphore, #tpu.memory_space<semaphore_mem>> -> memref<1x!tpu.dma_semaphore, #tpu.memory_space<semaphore_mem>>
    %140 = tpu.memref_squeeze %139 : memref<1x!tpu.dma_semaphore, #tpu.memory_space<semaphore_mem>> -> memref<!tpu.dma_semaphore, #tpu.memory_space<semaphore_mem>>
    tpu.wait_dma2 semaphore(%140 : memref<!tpu.dma_semaphore, #tpu.memory_space<semaphore_mem>>) src(%137 : memref<1x32xf32, #tpu.memory_space<any>>) dst(%138 : memref<1x32xf32, #tpu.memory_space<vmem>>)
    %c7_i32_99 = arith.constant 7 : i32
    %c0_i32_100 = arith.constant 0 : i32
    %c0_i32_101 = arith.constant 0 : i32
    %141 = tpu.memref_slice %arg2[%c0_i32_100, %c0_i32_101] : memref<32x32xf32, #tpu.memory_space<any>> -> memref<1x32xf32, #tpu.memory_space<any>>
    %c7_i32_102 = arith.constant 7 : i32
    %c0_i32_103 = arith.constant 0 : i32
    %142 = tpu.memref_slice %arg3[%c7_i32_102, %c0_i32_103] : memref<16x32xf32, #tpu.memory_space<vmem>> -> memref<1x32xf32, #tpu.memory_space<vmem>>
    %143 = tpu.memref_slice %arg4[%c7_i32_99] : memref<16x!tpu.dma_semaphore, #tpu.memory_space<semaphore_mem>> -> memref<1x!tpu.dma_semaphore, #tpu.memory_space<semaphore_mem>>
    %144 = tpu.memref_squeeze %143 : memref<1x!tpu.dma_semaphore, #tpu.memory_space<semaphore_mem>> -> memref<!tpu.dma_semaphore, #tpu.memory_space<semaphore_mem>>
    tpu.wait_dma2 semaphore(%144 : memref<!tpu.dma_semaphore, #tpu.memory_space<semaphore_mem>>) src(%141 : memref<1x32xf32, #tpu.memory_space<any>>) dst(%142 : memref<1x32xf32, #tpu.memory_space<vmem>>)
    %c8_i32_104 = arith.constant 8 : i32
    %c0_i32_105 = arith.constant 0 : i32
    %c0_i32_106 = arith.constant 0 : i32
    %145 = tpu.memref_slice %arg2[%c0_i32_105, %c0_i32_106] : memref<32x32xf32, #tpu.memory_space<any>> -> memref<1x32xf32, #tpu.memory_space<any>>
    %c8_i32_107 = arith.constant 8 : i32
    %c0_i32_108 = arith.constant 0 : i32
    %146 = tpu.memref_slice %arg3[%c8_i32_107, %c0_i32_108] : memref<16x32xf32, #tpu.memory_space<vmem>> -> memref<1x32xf32, #tpu.memory_space<vmem>>
    %147 = tpu.memref_slice %arg4[%c8_i32_104] : memref<16x!tpu.dma_semaphore, #tpu.memory_space<semaphore_mem>> -> memref<1x!tpu.dma_semaphore, #tpu.memory_space<semaphore_mem>>
    %148 = tpu.memref_squeeze %147 : memref<1x!tpu.dma_semaphore, #tpu.memory_space<semaphore_mem>> -> memref<!tpu.dma_semaphore, #tpu.memory_space<semaphore_mem>>
    tpu.wait_dma2 semaphore(%148 : memref<!tpu.dma_semaphore, #tpu.memory_space<semaphore_mem>>) src(%145 : memref<1x32xf32, #tpu.memory_space<any>>) dst(%146 : memref<1x32xf32, #tpu.memory_space<vmem>>)
    %c9_i32_109 = arith.constant 9 : i32
    %c0_i32_110 = arith.constant 0 : i32
    %c0_i32_111 = arith.constant 0 : i32
    %149 = tpu.memref_slice %arg2[%c0_i32_110, %c0_i32_111] : memref<32x32xf32, #tpu.memory_space<any>> -> memref<1x32xf32, #tpu.memory_space<any>>
    %c9_i32_112 = arith.constant 9 : i32
    %c0_i32_113 = arith.constant 0 : i32
    %150 = tpu.memref_slice %arg3[%c9_i32_112, %c0_i32_113] : memref<16x32xf32, #tpu.memory_space<vmem>> -> memref<1x32xf32, #tpu.memory_space<vmem>>
    %151 = tpu.memref_slice %arg4[%c9_i32_109] : memref<16x!tpu.dma_semaphore, #tpu.memory_space<semaphore_mem>> -> memref<1x!tpu.dma_semaphore, #tpu.memory_space<semaphore_mem>>
    %152 = tpu.memref_squeeze %151 : memref<1x!tpu.dma_semaphore, #tpu.memory_space<semaphore_mem>> -> memref<!tpu.dma_semaphore, #tpu.memory_space<semaphore_mem>>
    tpu.wait_dma2 semaphore(%152 : memref<!tpu.dma_semaphore, #tpu.memory_space<semaphore_mem>>) src(%149 : memref<1x32xf32, #tpu.memory_space<any>>) dst(%150 : memref<1x32xf32, #tpu.memory_space<vmem>>)
    %c10_i32_114 = arith.constant 10 : i32
    %c0_i32_115 = arith.constant 0 : i32
    %c0_i32_116 = arith.constant 0 : i32
    %153 = tpu.memref_slice %arg2[%c0_i32_115, %c0_i32_116] : memref<32x32xf32, #tpu.memory_space<any>> -> memref<1x32xf32, #tpu.memory_space<any>>
    %c10_i32_117 = arith.constant 10 : i32
    %c0_i32_118 = arith.constant 0 : i32
    %154 = tpu.memref_slice %arg3[%c10_i32_117, %c0_i32_118] : memref<16x32xf32, #tpu.memory_space<vmem>> -> memref<1x32xf32, #tpu.memory_space<vmem>>
    %155 = tpu.memref_slice %arg4[%c10_i32_114] : memref<16x!tpu.dma_semaphore, #tpu.memory_space<semaphore_mem>> -> memref<1x!tpu.dma_semaphore, #tpu.memory_space<semaphore_mem>>
    %156 = tpu.memref_squeeze %155 : memref<1x!tpu.dma_semaphore, #tpu.memory_space<semaphore_mem>> -> memref<!tpu.dma_semaphore, #tpu.memory_space<semaphore_mem>>
    tpu.wait_dma2 semaphore(%156 : memref<!tpu.dma_semaphore, #tpu.memory_space<semaphore_mem>>) src(%153 : memref<1x32xf32, #tpu.memory_space<any>>) dst(%154 : memref<1x32xf32, #tpu.memory_space<vmem>>)
    %c11_i32_119 = arith.constant 11 : i32
    %c0_i32_120 = arith.constant 0 : i32
    %c0_i32_121 = arith.constant 0 : i32
    %157 = tpu.memref_slice %arg2[%c0_i32_120, %c0_i32_121] : memref<32x32xf32, #tpu.memory_space<any>> -> memref<1x32xf32, #tpu.memory_space<any>>
    %c11_i32_122 = arith.constant 11 : i32
    %c0_i32_123 = arith.constant 0 : i32
    %158 = tpu.memref_slice %arg3[%c11_i32_122, %c0_i32_123] : memref<16x32xf32, #tpu.memory_space<vmem>> -> memref<1x32xf32, #tpu.memory_space<vmem>>
    %159 = tpu.memref_slice %arg4[%c11_i32_119] : memref<16x!tpu.dma_semaphore, #tpu.memory_space<semaphore_mem>> -> memref<1x!tpu.dma_semaphore, #tpu.memory_space<semaphore_mem>>
    %160 = tpu.memref_squeeze %159 : memref<1x!tpu.dma_semaphore, #tpu.memory_space<semaphore_mem>> -> memref<!tpu.dma_semaphore, #tpu.memory_space<semaphore_mem>>
    tpu.wait_dma2 semaphore(%160 : memref<!tpu.dma_semaphore, #tpu.memory_space<semaphore_mem>>) src(%157 : memref<1x32xf32, #tpu.memory_space<any>>) dst(%158 : memref<1x32xf32, #tpu.memory_space<vmem>>)
    %c12_i32_124 = arith.constant 12 : i32
    %c0_i32_125 = arith.constant 0 : i32
    %c0_i32_126 = arith.constant 0 : i32
    %161 = tpu.memref_slice %arg2[%c0_i32_125, %c0_i32_126] : memref<32x32xf32, #tpu.memory_space<any>> -> memref<1x32xf32, #tpu.memory_space<any>>
    %c12_i32_127 = arith.constant 12 : i32
    %c0_i32_128 = arith.constant 0 : i32
    %162 = tpu.memref_slice %arg3[%c12_i32_127, %c0_i32_128] : memref<16x32xf32, #tpu.memory_space<vmem>> -> memref<1x32xf32, #tpu.memory_space<vmem>>
    %163 = tpu.memref_slice %arg4[%c12_i32_124] : memref<16x!tpu.dma_semaphore, #tpu.memory_space<semaphore_mem>> -> memref<1x!tpu.dma_semaphore, #tpu.memory_space<semaphore_mem>>
    %164 = tpu.memref_squeeze %163 : memref<1x!tpu.dma_semaphore, #tpu.memory_space<semaphore_mem>> -> memref<!tpu.dma_semaphore, #tpu.memory_space<semaphore_mem>>
    tpu.wait_dma2 semaphore(%164 : memref<!tpu.dma_semaphore, #tpu.memory_space<semaphore_mem>>) src(%161 : memref<1x32xf32, #tpu.memory_space<any>>) dst(%162 : memref<1x32xf32, #tpu.memory_space<vmem>>)
    %c13_i32_129 = arith.constant 13 : i32
    %c0_i32_130 = arith.constant 0 : i32
    %c0_i32_131 = arith.constant 0 : i32
    %165 = tpu.memref_slice %arg2[%c0_i32_130, %c0_i32_131] : memref<32x32xf32, #tpu.memory_space<any>> -> memref<1x32xf32, #tpu.memory_space<any>>
    %c13_i32_132 = arith.constant 13 : i32
    %c0_i32_133 = arith.constant 0 : i32
    %166 = tpu.memref_slice %arg3[%c13_i32_132, %c0_i32_133] : memref<16x32xf32, #tpu.memory_space<vmem>> -> memref<1x32xf32, #tpu.memory_space<vmem>>
    %167 = tpu.memref_slice %arg4[%c13_i32_129] : memref<16x!tpu.dma_semaphore, #tpu.memory_space<semaphore_mem>> -> memref<1x!tpu.dma_semaphore, #tpu.memory_space<semaphore_mem>>
    %168 = tpu.memref_squeeze %167 : memref<1x!tpu.dma_semaphore, #tpu.memory_space<semaphore_mem>> -> memref<!tpu.dma_semaphore, #tpu.memory_space<semaphore_mem>>
    tpu.wait_dma2 semaphore(%168 : memref<!tpu.dma_semaphore, #tpu.memory_space<semaphore_mem>>) src(%165 : memref<1x32xf32, #tpu.memory_space<any>>) dst(%166 : memref<1x32xf32, #tpu.memory_space<vmem>>)
    %c14_i32_134 = arith.constant 14 : i32
    %c0_i32_135 = arith.constant 0 : i32
    %c0_i32_136 = arith.constant 0 : i32
    %169 = tpu.memref_slice %arg2[%c0_i32_135, %c0_i32_136] : memref<32x32xf32, #tpu.memory_space<any>> -> memref<1x32xf32, #tpu.memory_space<any>>
    %c14_i32_137 = arith.constant 14 : i32
    %c0_i32_138 = arith.constant 0 : i32
    %170 = tpu.memref_slice %arg3[%c14_i32_137, %c0_i32_138] : memref<16x32xf32, #tpu.memory_space<vmem>> -> memref<1x32xf32, #tpu.memory_space<vmem>>
    %171 = tpu.memref_slice %arg4[%c14_i32_134] : memref<16x!tpu.dma_semaphore, #tpu.memory_space<semaphore_mem>> -> memref<1x!tpu.dma_semaphore, #tpu.memory_space<semaphore_mem>>
    %172 = tpu.memref_squeeze %171 : memref<1x!tpu.dma_semaphore, #tpu.memory_space<semaphore_mem>> -> memref<!tpu.dma_semaphore, #tpu.memory_space<semaphore_mem>>
    tpu.wait_dma2 semaphore(%172 : memref<!tpu.dma_semaphore, #tpu.memory_space<semaphore_mem>>) src(%169 : memref<1x32xf32, #tpu.memory_space<any>>) dst(%170 : memref<1x32xf32, #tpu.memory_space<vmem>>)
    %c15_i32_139 = arith.constant 15 : i32
    %c0_i32_140 = arith.constant 0 : i32
    %c0_i32_141 = arith.constant 0 : i32
    %173 = tpu.memref_slice %arg2[%c0_i32_140, %c0_i32_141] : memref<32x32xf32, #tpu.memory_space<any>> -> memref<1x32xf32, #tpu.memory_space<any>>
    %c15_i32_142 = arith.constant 15 : i32
    %c0_i32_143 = arith.constant 0 : i32
    %174 = tpu.memref_slice %arg3[%c15_i32_142, %c0_i32_143] : memref<16x32xf32, #tpu.memory_space<vmem>> -> memref<1x32xf32, #tpu.memory_space<vmem>>
    %175 = tpu.memref_slice %arg4[%c15_i32_139] : memref<16x!tpu.dma_semaphore, #tpu.memory_space<semaphore_mem>> -> memref<1x!tpu.dma_semaphore, #tpu.memory_space<semaphore_mem>>
    %176 = tpu.memref_squeeze %175 : memref<1x!tpu.dma_semaphore, #tpu.memory_space<semaphore_mem>> -> memref<!tpu.dma_semaphore, #tpu.memory_space<semaphore_mem>>
    tpu.wait_dma2 semaphore(%176 : memref<!tpu.dma_semaphore, #tpu.memory_space<semaphore_mem>>) src(%173 : memref<1x32xf32, #tpu.memory_space<any>>) dst(%174 : memref<1x32xf32, #tpu.memory_space<vmem>>)
    return
  }
  func.func @transform_1(%arg0: i32, %arg1: memref<32xi32, #tpu.memory_space<smem>>) -> (i32, i32) {
    %c0_i32 = arith.constant 0 : i32
    %c0_i32_0 = arith.constant 0 : i32
    return %arg0, %c0_i32 : i32, i32
  }
}

</mosaic_0001>

<llo_original>
// kernel: tpu_custom_call.1
$region0: #{tpu_custom_call.1}
  #allocation0 [shape = 'u32[]', space=smem, size = 0x4, offset = 0x4, fixed_abs, tag = 'smem constant byte address 0x4 - core index']
  #allocation1 [shape = 'u32[144,128]{1,0:T(1,128)}', space=vmem, size = 0x12000, scoped, tag = 'internal scratch']
  #allocation2 [shape = 's32[16]{0}', space=sflag, size = 0x40, scoped, tag = 'scratch operand']
  #allocation3 [shape = 's32[1]{0}', space=sflag, size = 0x4, scoped, tag = 'scoped memory for tpu_custom_call.1']
  #allocation4 [shape = 'u8[512]{0}', space=smem, size = 0x200, scoped, tag = 'prefetched SMEM operand 0']
  #allocation7 [shape = 's32[]', space=sflag, size = 0x4, offset = 0, fixed_abs, tag = 'sflag constant byte address 0x0 - dummy sync flag']
  #allocation8 [shape = 's32[]', space=sflag, size = 0x4, offset = 0, fixed_abs, tag = 'sflag constant byte address 0x0 - dummy sync flag']
  #allocation9 [shape = 'u32[]', space=smem, size = 0x4, offset = 0x44, fixed_abs, tag = 'smem constant byte address 0x44 - assertion arg 0']
  #allocation10 [shape = 'u32[]', space=smem, size = 0x4, offset = 0x48, fixed_abs, tag = 'smem constant byte address 0x48 - assertion arg 1']
  #allocation11 [shape = 's32[]', space=sflag, size = 0x4, offset = 0, fixed_abs, tag = 'sflag constant byte address 0x0 - dummy sync flag']
  #allocation12 [shape = 's32[]', space=sflag, size = 0x4, offset = 0, fixed_abs, tag = 'sflag constant byte address 0x0 - dummy sync flag']
  #allocation13 [shape = 's32[]', space=sflag, size = 0x4, offset = 0, fixed_abs, tag = 'sflag constant byte address 0x0 - dummy sync flag']
  #allocation14 [shape = 's32[]', space=sflag, size = 0x4, offset = 0, fixed_abs, tag = 'sflag constant byte address 0x0 - dummy sync flag']
  #allocation15 [shape = 's32[]', space=sflag, size = 0x4, offset = 0, fixed_abs, tag = 'sflag constant byte address 0x0 - dummy sync flag']
  #allocation16 [shape = 's32[]', space=sflag, size = 0x4, offset = 0, fixed_abs, tag = 'sflag constant byte address 0x0 - dummy sync flag']
  #allocation17 [shape = 's32[]', space=sflag, size = 0x4, offset = 0, fixed_abs, tag = 'sflag constant byte address 0x0 - dummy sync flag']
  #allocation18 [shape = 's32[]', space=sflag, size = 0x4, offset = 0, fixed_abs, tag = 'sflag constant byte address 0x0 - dummy sync flag']
  #allocation19 [shape = 's32[]', space=sflag, size = 0x4, offset = 0, fixed_abs, tag = 'sflag constant byte address 0x0 - dummy sync flag']
  #allocation20 [shape = 's32[]', space=sflag, size = 0x4, offset = 0, fixed_abs, tag = 'sflag constant byte address 0x0 - dummy sync flag']
  #allocation21 [shape = 's32[]', space=sflag, size = 0x4, offset = 0, fixed_abs, tag = 'sflag constant byte address 0x0 - dummy sync flag']
  #allocation22 [shape = 's32[]', space=sflag, size = 0x4, offset = 0, fixed_abs, tag = 'sflag constant byte address 0x0 - dummy sync flag']
  #allocation23 [shape = 's32[]', space=sflag, size = 0x4, offset = 0, fixed_abs, tag = 'sflag constant byte address 0x0 - dummy sync flag']
  #allocation24 [shape = 's32[]', space=sflag, size = 0x4, offset = 0, fixed_abs, tag = 'sflag constant byte address 0x0 - dummy sync flag']
  #allocation25 [shape = 's32[]', space=sflag, size = 0x4, offset = 0, fixed_abs, tag = 'sflag constant byte address 0x0 - dummy sync flag']
  #allocation26 [shape = 's32[]', space=sflag, size = 0x4, offset = 0, fixed_abs, tag = 'sflag constant byte address 0x0 - dummy sync flag']
  #allocation27 [shape = 's32[]', space=sflag, size = 0x4, offset = 0, fixed_abs, tag = 'sflag constant byte address 0x0 - dummy sync flag']
  #allocation28 [shape = 's32[]', space=sflag, size = 0x4, offset = 0, fixed_abs, tag = 'sflag constant byte address 0x0 - dummy sync flag']
  #allocation29 [shape = 's32[]', space=sflag, size = 0x4, offset = 0, fixed_abs, tag = 'sflag constant byte address 0x0 - dummy sync flag']
  #allocation30 [shape = 's32[]', space=sflag, size = 0x4, offset = 0, fixed_abs, tag = 'sflag constant byte address 0x0 - dummy sync flag']
  #allocation31 [shape = 's32[]', space=sflag, size = 0x4, offset = 0, fixed_abs, tag = 'sflag constant byte address 0x0 - dummy sync flag']
  #allocation32 [shape = 's32[]', space=sflag, size = 0x4, offset = 0, fixed_abs, tag = 'sflag constant byte address 0x0 - dummy sync flag']
  #allocation33 [shape = 's32[]', space=sflag, size = 0x4, offset = 0, fixed_abs, tag = 'sflag constant byte address 0x0 - dummy sync flag']
  #allocation34 [shape = 's32[]', space=sflag, size = 0x4, offset = 0, fixed_abs, tag = 'sflag constant byte address 0x0 - dummy sync flag']
  #allocation35 [shape = 's32[]', space=sflag, size = 0x4, offset = 0, fixed_abs, tag = 'sflag constant byte address 0x0 - dummy sync flag']
  #allocation36 [shape = 's32[]', space=sflag, size = 0x4, offset = 0, fixed_abs, tag = 'sflag constant byte address 0x0 - dummy sync flag']
  #allocation37 [shape = 's32[]', space=sflag, size = 0x4, offset = 0, fixed_abs, tag = 'sflag constant byte address 0x0 - dummy sync flag']
  #allocation38 [shape = 's32[]', space=sflag, size = 0x4, offset = 0, fixed_abs, tag = 'sflag constant byte address 0x0 - dummy sync flag']
  #allocation39 [shape = 's32[]', space=sflag, size = 0x4, offset = 0, fixed_abs, tag = 'sflag constant byte address 0x0 - dummy sync flag']
  #allocation40 [shape = 's32[]', space=sflag, size = 0x4, offset = 0, fixed_abs, tag = 'sflag constant byte address 0x0 - dummy sync flag']
  %s0 = inlined_call_operand.hbm [shape: s32[32], index: 0, kind: input, shape index: {}]
  %s1 = inlined_call_operand.hbm [shape: f32[32,32], index: 1, kind: input, shape index: {}]
  %s2 = inlined_call_operand.hbm [shape: f32[32,32], index: 2, kind: output, shape index: {}]
  %s3 = sld [smem:[#allocation0]]
  $region89: #{tpu_custom_call.1} parent=0
    _
  %s5 = ssub.s32 1, %s3
  %s6 = scalar_select 0, %s5, %s3
  %8 = dma.hbm_to_smem %s0, 16, [#allocation4], [#allocation3]
  %9 = dma.done [#allocation3], 16
  %10 = sfence
  $region1: #{tpu_custom_call.1} parent=0
    #allocation5 [shape = 'u8[16384]{0}', space=vmem, size = 0x4000, scoped, tag = 'output window, operand 0']
    #allocation6 [shape = 's32[2]{0}', space=sflag, size = 0x8, scoped, tag = 'scoped memory for tpu_custom_call.1']
    %11 = vsyncpa [#allocation6], 0
    %s12 = scalar_lea.sflag [#allocation6], 1
    %13 = vsyncpa %s12, 0
    loop: start=0, step=1, limit=3
    $region2: #{tpu_custom_call.1} parent=1 // loop_pre_header
      _
    $region3: #{tpu_custom_call.1} parent=1 // loop_header
      %s15 = sphi 0, %s19
      %p16 = scmp.ge.s32.totalorder %s15, 3
      %s24 = sphi 0, %s26
      %s27 = sphi 0, %s24
      %s37 = sphi 0, %s27
    $region4: #{tpu_custom_call.1} parent=1 // loop_header_branch
      %18 = sbr.rel (%p16) target = $region8
    $region5: #{tpu_custom_call.1} parent=1 // loop_body
      %s20 = ssub.s32 %s15, 1
      %s21 = sadd.s32 %s15, 1
      %s22 = ssub.s32 %s15, %s21
      %p23 = scmp.eq.s32.totalorder %s22, 0
      %s25 = sadd.s32 %s24, 1
      %s26 = scalar_select %p23, %s24, %s25
      %p28 = pneg %p23
      %p29 = scmp.eq.s32.totalorder %s15, 1
      %p30 = por %p28, %p29
      %p31 = scmp.ne.s32.totalorder %s24, %s27
      %p32 = scmp.eq.s32.totalorder %s15, 0
      %p33 = por %p31, %p32
      %p34 = scmp.ne.s32.totalorder %s24, %s27
      %p35 = scmp.eq.s32.totalorder %s20, 1
      %p36 = por %p34, %p35
      %p38 = scmp.ne.s32.totalorder %s27, %s37
      %p39 = scmp.eq.s32.totalorder %s20, 0
      %p40 = por %p38, %p39
      %p41 = scmp.lt.s32.totalorder %s15, 2
      // Predicated region
      $region9: #{tpu_custom_call.1} parent=5 // pred_check
        %p42 = pneg %p41
      $region10: #{tpu_custom_call.1} parent=5 // pred_check_branch
        %44 = sbr.rel (%p42) target = $region12
      $region11: #{tpu_custom_call.1} parent=5 // pred_region
        %p45 = pneg %p33
        %p46 = pneg %p30
        %s47 = sand.u32 %s24, 1
        %s48 = scalar_lea.sflag [#allocation6], %s47
        %s49 = sand.u32 %s24, 1
        %s50 = smul.addr %s49, 16
        %s51 = scalar_lea.vmem [#allocation5], %s50
        %s52 = smul.u32 2, %s15
        %s53 = smul.u32 %s15, 16
        %s54 = sld [smem:[#allocation4 + %s53]]
        %s55 = smul.addr %s54, 16
        %s56 = scalar_lea.hbm %s1, %s55
        // Predicated region
        $region13: #{tpu_custom_call.1} parent=11 // pred_check
          _
        $region14: #{tpu_custom_call.1} parent=11 // pred_check_branch
          %58 = sbr.rel target = $region16
        $region15: #{tpu_custom_call.1} parent=11 // pred_region
          %59 = sst [smem:[#allocation9]] [#allocation8]
          %60 = sst [smem:[#allocation10]] [#allocation7]
        $region16: #{tpu_custom_call.1} parent=11 // pred_fallthru
          _
        %62 = shalt.err (0)
        %s64 = sshll.u32 %s51, 4
        %s65 = int_to_ptr.vmem [resolvable:$true] %s64
        %67 = dma.hbm_to_vmem [thread:$0]  %s56, 16, %s65, [#allocation2]
        %s68 = sadd.s32 %s53, 1
        %s69 = sld [smem:[#allocation4 + %s68]]
        %s70 = smul.addr %s69, 16
        %s71 = scalar_lea.hbm %s1, %s70
        %s72 = scalar_lea.vmem %s51, 1 [#allocation5]
        %s73 = scalar_lea.sflag [#allocation2], 1
        // Predicated region
        $region17: #{tpu_custom_call.1} parent=11 // pred_check
          _
        $region18: #{tpu_custom_call.1} parent=11 // pred_check_branch
          %75 = sbr.rel target = $region20
        $region19: #{tpu_custom_call.1} parent=11 // pred_region
          %76 = sst [smem:[#allocation9]] [#allocation12]
          %77 = sst [smem:[#allocation10]] [#allocation11]
        $region20: #{tpu_custom_call.1} parent=11 // pred_fallthru
          _
        %79 = shalt.err (0)
        %s81 = sshll.u32 %s72, 4
        %s82 = int_to_ptr.vmem [resolvable:$true] %s81
        %84 = dma.hbm_to_vmem [thread:$0]  %s71, 16, %s82, %s73
        %s85 = sadd.s32 %s53, 2
        %s86 = sld [smem:[#allocation4 + %s85]]
        %s87 = smul.addr %s86, 16
        %s88 = scalar_lea.hbm %s1, %s87
        %s89 = scalar_lea.vmem %s51, 2 [#allocation5]
        %s90 = scalar_lea.sflag [#allocation2], 2
        // Predicated region
        $region21: #{tpu_custom_call.1} parent=11 // pred_check
          _
        $region22: #{tpu_custom_call.1} parent=11 // pred_check_branch
          %92 = sbr.rel target = $region24
        $region23: #{tpu_custom_call.1} parent=11 // pred_region
          %93 = sst [smem:[#allocation9]] [#allocation14]
          %94 = sst [smem:[#allocation10]] [#allocation13]
        $region24: #{tpu_custom_call.1} parent=11 // pred_fallthru
          _
        %96 = shalt.err (0)
        %s98 = sshll.u32 %s89, 4
        %s99 = int_to_ptr.vmem [resolvable:$true] %s98
        %101 = dma.hbm_to_vmem [thread:$0]  %s88, 16, %s99, %s90
        %s102 = sadd.s32 %s53, 3
        %s103 = sld [smem:[#allocation4 + %s102]]
        %s104 = smul.addr %s103, 16
        %s105 = scalar_lea.hbm %s1, %s104
        %s106 = scalar_lea.vmem %s51, 3 [#allocation5]
        %s107 = scalar_lea.sflag [#allocation2], 3
        // Predicated region
        $region25: #{tpu_custom_call.1} parent=11 // pred_check
          _
        $region26: #{tpu_custom_call.1} parent=11 // pred_check_branch
          %109 = sbr.rel target = $region28
        $region27: #{tpu_custom_call.1} parent=11 // pred_region
          %110 = sst [smem:[#allocation9]] [#allocation16]
          %111 = sst [smem:[#allocation10]] [#allocation15]
        $region28: #{tpu_custom_call.1} parent=11 // pred_fallthru
          _
        %113 = shalt.err (0)
        %s115 = sshll.u32 %s106, 4
        %s116 = int_to_ptr.vmem [resolvable:$true] %s115
        %118 = dma.hbm_to_vmem [thread:$0]  %s105, 16, %s116, %s107
        %s119 = sadd.s32 %s53, 4
        %s120 = sld [smem:[#allocation4 + %s119]]
        %s121 = smul.addr %s120, 16
        %s122 = scalar_lea.hbm %s1, %s121
        %s123 = scalar_lea.vmem %s51, 4 [#allocation5]
        %s124 = scalar_lea.sflag [#allocation2], 4
        // Predicated region
        $region29: #{tpu_custom_call.1} parent=11 // pred_check
          _
        $region30: #{tpu_custom_call.1} parent=11 // pred_check_branch
          %126 = sbr.rel target = $region32
        $region31: #{tpu_custom_call.1} parent=11 // pred_region
          %127 = sst [smem:[#allocation9]] [#allocation18]
          %128 = sst [smem:[#allocation10]] [#allocation17]
        $region32: #{tpu_custom_call.1} parent=11 // pred_fallthru
          _
        %130 = shalt.err (0)
        %s132 = sshll.u32 %s123, 4
        %s133 = int_to_ptr.vmem [resolvable:$true] %s132
        %135 = dma.hbm_to_vmem [thread:$0]  %s122, 16, %s133, %s124
        %s136 = sadd.s32 %s53, 5
        %s137 = sld [smem:[#allocation4 + %s136]]
        %s138 = smul.addr %s137, 16
        %s139 = scalar_lea.hbm %s1, %s138
        %s140 = scalar_lea.vmem %s51, 5 [#allocation5]
        %s141 = scalar_lea.sflag [#allocation2], 5
        // Predicated region
        $region33: #{tpu_custom_call.1} parent=11 // pred_check
          _
        $region34: #{tpu_custom_call.1} parent=11 // pred_check_branch
          %143 = sbr.rel target = $region36
        $region35: #{tpu_custom_call.1} parent=11 // pred_region
          %144 = sst [smem:[#allocation9]] [#allocation20]
          %145 = sst [smem:[#allocation10]] [#allocation19]
        $region36: #{tpu_custom_call.1} parent=11 // pred_fallthru
          _
        %147 = shalt.err (0)
        %s149 = sshll.u32 %s140, 4
        %s150 = int_to_ptr.vmem [resolvable:$true] %s149
        %152 = dma.hbm_to_vmem [thread:$0]  %s139, 16, %s150, %s141
        %s153 = sadd.s32 %s53, 6
        %s154 = sld [smem:[#allocation4 + %s153]]
        %s155 = smul.addr %s154, 16
        %s156 = scalar_lea.hbm %s1, %s155
        %s157 = scalar_lea.vmem %s51, 6 [#allocation5]
        %s158 = scalar_lea.sflag [#allocation2], 6
        // Predicated region
        $region37: #{tpu_custom_call.1} parent=11 // pred_check
          _
        $region38: #{tpu_custom_call.1} parent=11 // pred_check_branch
          %160 = sbr.rel target = $region40
        $region39: #{tpu_custom_call.1} parent=11 // pred_region
          %161 = sst [smem:[#allocation9]] [#allocation22]
          %162 = sst [smem:[#allocation10]] [#allocation21]
        $region40: #{tpu_custom_call.1} parent=11 // pred_fallthru
          _
        %164 = shalt.err (0)
        %s166 = sshll.u32 %s157, 4
        %s167 = int_to_ptr.vmem [resolvable:$true] %s166
        %169 = dma.hbm_to_vmem [thread:$0]  %s156, 16, %s167, %s158
        %s170 = sadd.s32 %s53, 7
        %s171 = sld [smem:[#allocation4 + %s170]]
        %s172 = smul.addr %s171, 16
        %s173 = scalar_lea.hbm %s1, %s172
        %s174 = scalar_lea.vmem %s51, 7 [#allocation5]
        %s175 = scalar_lea.sflag [#allocation2], 7
        // Predicated region
        $region41: #{tpu_custom_call.1} parent=11 // pred_check
          _
        $region42: #{tpu_custom_call.1} parent=11 // pred_check_branch
          %177 = sbr.rel target = $region44
        $region43: #{tpu_custom_call.1} parent=11 // pred_region
          %178 = sst [smem:[#allocation9]] [#allocation24]
          %179 = sst [smem:[#allocation10]] [#allocation23]
        $region44: #{tpu_custom_call.1} parent=11 // pred_fallthru
          _
        %181 = shalt.err (0)
        %s183 = sshll.u32 %s174, 4
        %s184 = int_to_ptr.vmem [resolvable:$true] %s183
        %186 = dma.hbm_to_vmem [thread:$0]  %s173, 16, %s184, %s175
        %s187 = sadd.s32 %s53, 8
        %s188 = sld [smem:[#allocation4 + %s187]]
        %s189 = smul.addr %s188, 16
        %s190 = scalar_lea.hbm %s1, %s189
        %s191 = scalar_lea.vmem %s51, 8 [#allocation5]
        %s192 = scalar_lea.sflag [#allocation2], 8
        // Predicated region
        $region45: #{tpu_custom_call.1} parent=11 // pred_check
          _
        $region46: #{tpu_custom_call.1} parent=11 // pred_check_branch
          %194 = sbr.rel target = $region48
        $region47: #{tpu_custom_call.1} parent=11 // pred_region
          %195 = sst [smem:[#allocation9]] [#allocation26]
          %196 = sst [smem:[#allocation10]] [#allocation25]
        $region48: #{tpu_custom_call.1} parent=11 // pred_fallthru
          _
        %198 = shalt.err (0)
        %s200 = sshll.u32 %s191, 4
        %s201 = int_to_ptr.vmem [resolvable:$true] %s200
        %203 = dma.hbm_to_vmem [thread:$0]  %s190, 16, %s201, %s192
        %s204 = sadd.s32 %s53, 9
        %s205 = sld [smem:[#allocation4 + %s204]]
        %s206 = smul.addr %s205, 16
        %s207 = scalar_lea.hbm %s1, %s206
        %s208 = scalar_lea.vmem %s51, 9 [#allocation5]
        %s209 = scalar_lea.sflag [#allocation2], 9
        // Predicated region
        $region49: #{tpu_custom_call.1} parent=11 // pred_check
          _
        $region50: #{tpu_custom_call.1} parent=11 // pred_check_branch
          %211 = sbr.rel target = $region52
        $region51: #{tpu_custom_call.1} parent=11 // pred_region
          %212 = sst [smem:[#allocation9]] [#allocation28]
          %213 = sst [smem:[#allocation10]] [#allocation27]
        $region52: #{tpu_custom_call.1} parent=11 // pred_fallthru
          _
        %215 = shalt.err (0)
        %s217 = sshll.u32 %s208, 4
        %s218 = int_to_ptr.vmem [resolvable:$true] %s217
        %220 = dma.hbm_to_vmem [thread:$0]  %s207, 16, %s218, %s209
        %s221 = sadd.s32 %s53, 10
        %s222 = sld [smem:[#allocation4 + %s221]]
        %s223 = smul.addr %s222, 16
        %s224 = scalar_lea.hbm %s1, %s223
        %s225 = scalar_lea.vmem %s51, 10 [#allocation5]
        %s226 = scalar_lea.sflag [#allocation2], 10
        // Predicated region
        $region53: #{tpu_custom_call.1} parent=11 // pred_check
          _
        $region54: #{tpu_custom_call.1} parent=11 // pred_check_branch
          %228 = sbr.rel target = $region56
        $region55: #{tpu_custom_call.1} parent=11 // pred_region
          %229 = sst [smem:[#allocation9]] [#allocation30]
          %230 = sst [smem:[#allocation10]] [#allocation29]
        $region56: #{tpu_custom_call.1} parent=11 // pred_fallthru
          _
        %232 = shalt.err (0)
        %s234 = sshll.u32 %s225, 4
        %s235 = int_to_ptr.vmem [resolvable:$true] %s234
        %237 = dma.hbm_to_vmem [thread:$0]  %s224, 16, %s235, %s226
        %s238 = sadd.s32 %s53, 11
        %s239 = sld [smem:[#allocation4 + %s238]]
        %s240 = smul.addr %s239, 16
        %s241 = scalar_lea.hbm %s1, %s240
        %s242 = scalar_lea.vmem %s51, 11 [#allocation5]
        %s243 = scalar_lea.sflag [#allocation2], 11
        // Predicated region
        $region57: #{tpu_custom_call.1} parent=11 // pred_check
          _
        $region58: #{tpu_custom_call.1} parent=11 // pred_check_branch
          %245 = sbr.rel target = $region60
        $region59: #{tpu_custom_call.1} parent=11 // pred_region
          %246 = sst [smem:[#allocation9]] [#allocation32]
          %247 = sst [smem:[#allocation10]] [#allocation31]
        $region60: #{tpu_custom_call.1} parent=11 // pred_fallthru
          _
        %249 = shalt.err (0)
        %s251 = sshll.u32 %s242, 4
        %s252 = int_to_ptr.vmem [resolvable:$true] %s251
        %254 = dma.hbm_to_vmem [thread:$0]  %s241, 16, %s252, %s243
        %s255 = sadd.s32 %s53, 12
        %s256 = sld [smem:[#allocation4 + %s255]]
        %s257 = smul.addr %s256, 16
        %s258 = scalar_lea.hbm %s1, %s257
        %s259 = scalar_lea.vmem %s51, 12 [#allocation5]
        %s260 = scalar_lea.sflag [#allocation2], 12
        // Predicated region
        $region61: #{tpu_custom_call.1} parent=11 // pred_check
          _
        $region62: #{tpu_custom_call.1} parent=11 // pred_check_branch
          %262 = sbr.rel target = $region64
        $region63: #{tpu_custom_call.1} parent=11 // pred_region
          %263 = sst [smem:[#allocation9]] [#allocation34]
          %264 = sst [smem:[#allocation10]] [#allocation33]
        $region64: #{tpu_custom_call.1} parent=11 // pred_fallthru
          _
        %266 = shalt.err (0)
        %s268 = sshll.u32 %s259, 4
        %s269 = int_to_ptr.vmem [resolvable:$true] %s268
        %271 = dma.hbm_to_vmem [thread:$0]  %s258, 16, %s269, %s260
        %s272 = sadd.s32 %s53, 13
        %s273 = sld [smem:[#allocation4 + %s272]]
        %s274 = smul.addr %s273, 16
        %s275 = scalar_lea.hbm %s1, %s274
        %s276 = scalar_lea.vmem %s51, 13 [#allocation5]
        %s277 = scalar_lea.sflag [#allocation2], 13
        // Predicated region
        $region65: #{tpu_custom_call.1} parent=11 // pred_check
          _
        $region66: #{tpu_custom_call.1} parent=11 // pred_check_branch
          %279 = sbr.rel target = $region68
        $region67: #{tpu_custom_call.1} parent=11 // pred_region
          %280 = sst [smem:[#allocation9]] [#allocation36]
          %281 = sst [smem:[#allocation10]] [#allocation35]
        $region68: #{tpu_custom_call.1} parent=11 // pred_fallthru
          _
        %283 = shalt.err (0)
        %s285 = sshll.u32 %s276, 4
        %s286 = int_to_ptr.vmem [resolvable:$true] %s285
        %288 = dma.hbm_to_vmem [thread:$0]  %s275, 16, %s286, %s277
        %s289 = sadd.s32 %s53, 14
        %s290 = sld [smem:[#allocation4 + %s289]]
        %s291 = smul.addr %s290, 16
        %s292 = scalar_lea.hbm %s1, %s291
        %s293 = scalar_lea.vmem %s51, 14 [#allocation5]
        %s294 = scalar_lea.sflag [#allocation2], 14
        // Predicated region
        $region69: #{tpu_custom_call.1} parent=11 // pred_check
          _
        $region70: #{tpu_custom_call.1} parent=11 // pred_check_branch
          %296 = sbr.rel target = $region72
        $region71: #{tpu_custom_call.1} parent=11 // pred_region
          %297 = sst [smem:[#allocation9]] [#allocation38]
          %298 = sst [smem:[#allocation10]] [#allocation37]
        $region72: #{tpu_custom_call.1} parent=11 // pred_fallthru
          _
        %300 = shalt.err (0)
        %s302 = sshll.u32 %s293, 4
        %s303 = int_to_ptr.vmem [resolvable:$true] %s302
        %305 = dma.hbm_to_vmem [thread:$0]  %s292, 16, %s303, %s294
        %s306 = sadd.s32 %s53, 15
        %s307 = sld [smem:[#allocation4 + %s306]]
        %s308 = smul.addr %s307, 16
        %s309 = scalar_lea.hbm %s1, %s308
        %s310 = scalar_lea.vmem %s51, 15 [#allocation5]
        %s311 = scalar_lea.sflag [#allocation2], 15
        // Predicated region
        $region73: #{tpu_custom_call.1} parent=11 // pred_check
          _
        $region74: #{tpu_custom_call.1} parent=11 // pred_check_branch
          %313 = sbr.rel target = $region76
        $region75: #{tpu_custom_call.1} parent=11 // pred_region
          %314 = sst [smem:[#allocation9]] [#allocation40]
          %315 = sst [smem:[#allocation10]] [#allocation39]
        $region76: #{tpu_custom_call.1} parent=11 // pred_fallthru
          _
        %317 = shalt.err (0)
        %s319 = sshll.u32 %s310, 4
        %s320 = int_to_ptr.vmem [resolvable:$true] %s319
        %322 = dma.hbm_to_vmem [thread:$0]  %s309, 16, %s320, %s311
        %s323 = smul.u32 1, 1
        %s324 = sshll.u32 %s323, 4
        %325 = dma.done [#allocation2], %s324
        %s326 = sshll.u32 %s323, 4
        %327 = dma.done %s73, %s326
        %s328 = sshll.u32 %s323, 4
        %329 = dma.done %s90, %s328
        %s330 = sshll.u32 %s323, 4
        %331 = dma.done %s107, %s330
        %s332 = sshll.u32 %s323, 4
        %333 = dma.done %s124, %s332
        %s334 = sshll.u32 %s323, 4
        %335 = dma.done %s141, %s334
        %s336 = sshll.u32 %s323, 4
        %337 = dma.done %s158, %s336
        %s338 = sshll.u32 %s323, 4
        %339 = dma.done %s175, %s338
        %s340 = sshll.u32 %s323, 4
        %341 = dma.done %s192, %s340
        %s342 = sshll.u32 %s323, 4
        %343 = dma.done %s209, %s342
        %s344 = sshll.u32 %s323, 4
        %345 = dma.done %s226, %s344
        %s346 = sshll.u32 %s323, 4
        %347 = dma.done %s243, %s346
        %s348 = sshll.u32 %s323, 4
        %349 = dma.done %s260, %s348
        %s350 = sshll.u32 %s323, 4
        %351 = dma.done %s277, %s350
        %s352 = sshll.u32 %s323, 4
        %353 = dma.done %s294, %s352
        %s354 = sshll.u32 %s323, 4
        %355 = dma.done %s311, %s354
        %s356 = sand.u32 %s24, 1
        %s357 = scalar_lea.sflag [#allocation6], %s356
        %s358 = sand.u32 %s24, 1
        %s359 = smul.addr %s358, 16
        %s360 = scalar_lea.vmem [#allocation5], %s359
        // Predicated region
        $region77: #{tpu_custom_call.1} parent=11 // pred_check
          %p361 = pneg %p30
        $region78: #{tpu_custom_call.1} parent=11 // pred_check_branch
          %363 = sbr.rel (%p361) target = $region80
        $region79: #{tpu_custom_call.1} parent=11 // pred_region
          %s364 = smul.u32 2, %s15
          %s366 = ssub.s32 256, 256
          %367 = vsyncadd %s357, %s366
          %s368 = smul.addr %s364, 128
          %s369 = scalar_lea.hbm %s2, %s368
          %s370 = sshll.u32 %s360, 4
          %s371 = int_to_ptr.vmem [resolvable:$true] %s370
          %376 = dma.vmem_to_hbm [thread:$0]  %s371, 256, %s369, %s357, 128, 128, 8
        $region80: #{tpu_custom_call.1} parent=11 // pred_fallthru
          _
      $region12: #{tpu_custom_call.1} parent=5 // pred_fallthru
        _
      %p377 = scmp.le.s32.totalorder 1, %s15
      // Predicated region
      $region81: #{tpu_custom_call.1} parent=5 // pred_check
        %p378 = pneg %p377
      $region82: #{tpu_custom_call.1} parent=5 // pred_check_branch
        %380 = sbr.rel (%p378) target = $region84
      $region83: #{tpu_custom_call.1} parent=5 // pred_region
        %s381 = ssub.s32 %s15, 1
        // Predicated region
        $region85: #{tpu_custom_call.1} parent=83 // pred_check
          %p382 = pneg %p36
        $region86: #{tpu_custom_call.1} parent=83 // pred_check_branch
          %384 = sbr.rel (%p382) target = $region88
        $region87: #{tpu_custom_call.1} parent=83 // pred_region
          %s385 = sand.u32 %s27, 1
          %s386 = scalar_lea.sflag [#allocation6], %s385
          %s387 = sand.u32 %s27, 1
          %s388 = smul.addr %s387, 16
          %s389 = scalar_lea.vmem [#allocation5], %s388
          %390 = dma.done %s386, 256
        $region88: #{tpu_custom_call.1} parent=83 // pred_fallthru
          _
      $region84: #{tpu_custom_call.1} parent=5 // pred_fallthru
        _
    $region6: #{tpu_custom_call.1} parent=1 // loop_footer
      %s19 = sadd.s32 1, %s15
    $region7: #{tpu_custom_call.1} parent=1 // loop_footer_branch
      %14 = sbr.rel target = $region3
    $region8: #{tpu_custom_call.1} parent=1 // loop_exit
      _
    %391 = vsyncpa [#allocation6], 1
    %s392 = scalar_lea.sflag [#allocation6], 1
    %393 = vsyncpa %s392, 1
  %394 = vsyncmov [#allocation2]
  %s395 = vpop.sfrf %394
  %p396 = scmp.eq.s32.totalorder %s395, 0
  %p397 = pneg %p396
  %399 = shalt.err (%p397)
  %s400 = scalar_lea.sflag [#allocation2], 1
  %401 = vsyncmov %s400
  %s402 = vpop.sfrf %401
  %p403 = scmp.eq.s32.totalorder %s402, 0
  %p404 = pneg %p403
  %406 = shalt.err (%p404)
  %s407 = scalar_lea.sflag [#allocation2], 2
  %408 = vsyncmov %s407
  %s409 = vpop.sfrf %408
  %p410 = scmp.eq.s32.totalorder %s409, 0
  %p411 = pneg %p410
  %413 = shalt.err (%p411)
  %s414 = scalar_lea.sflag [#allocation2], 3
  %415 = vsyncmov %s414
  %s416 = vpop.sfrf %415
  %p417 = scmp.eq.s32.totalorder %s416, 0
  %p418 = pneg %p417
  %420 = shalt.err (%p418)
  %s421 = scalar_lea.sflag [#allocation2], 4
  %422 = vsyncmov %s421
  %s423 = vpop.sfrf %422
  %p424 = scmp.eq.s32.totalorder %s423, 0
  %p425 = pneg %p424
  %427 = shalt.err (%p425)
  %s428 = scalar_lea.sflag [#allocation2], 5
  %429 = vsyncmov %s428
  %s430 = vpop.sfrf %429
  %p431 = scmp.eq.s32.totalorder %s430, 0
  %p432 = pneg %p431
  %434 = shalt.err (%p432)
  %s435 = scalar_lea.sflag [#allocation2], 6
  %436 = vsyncmov %s435
  %s437 = vpop.sfrf %436
  %p438 = scmp.eq.s32.totalorder %s437, 0
  %p439 = pneg %p438
  %441 = shalt.err (%p439)
  %s442 = scalar_lea.sflag [#allocation2], 7
  %443 = vsyncmov %s442
  %s444 = vpop.sfrf %443
  %p445 = scmp.eq.s32.totalorder %s444, 0
  %p446 = pneg %p445
  %448 = shalt.err (%p446)
  %s449 = scalar_lea.sflag [#allocation2], 8
  %450 = vsyncmov %s449
  %s451 = vpop.sfrf %450
  %p452 = scmp.eq.s32.totalorder %s451, 0
  %p453 = pneg %p452
  %455 = shalt.err (%p453)
  %s456 = scalar_lea.sflag [#allocation2], 9
  %457 = vsyncmov %s456
  %s458 = vpop.sfrf %457
  %p459 = scmp.eq.s32.totalorder %s458, 0
  %p460 = pneg %p459
  %462 = shalt.err (%p460)
  %s463 = scalar_lea.sflag [#allocation2], 10
  %464 = vsyncmov %s463
  %s465 = vpop.sfrf %464
  %p466 = scmp.eq.s32.totalorder %s465, 0
  %p467 = pneg %p466
  %469 = shalt.err (%p467)
  %s470 = scalar_lea.sflag [#allocation2], 11
  %471 = vsyncmov %s470
  %s472 = vpop.sfrf %471
  %p473 = scmp.eq.s32.totalorder %s472, 0
  %p474 = pneg %p473
  %476 = shalt.err (%p474)
  %s477 = scalar_lea.sflag [#allocation2], 12
  %478 = vsyncmov %s477
  %s479 = vpop.sfrf %478
  %p480 = scmp.eq.s32.totalorder %s479, 0
  %p481 = pneg %p480
  %483 = shalt.err (%p481)
  %s484 = scalar_lea.sflag [#allocation2], 13
  %485 = vsyncmov %s484
  %s486 = vpop.sfrf %485
  %p487 = scmp.eq.s32.totalorder %s486, 0
  %p488 = pneg %p487
  %490 = shalt.err (%p488)
  %s491 = scalar_lea.sflag [#allocation2], 14
  %492 = vsyncmov %s491
  %s493 = vpop.sfrf %492
  %p494 = scmp.eq.s32.totalorder %s493, 0
  %p495 = pneg %p494
  %497 = shalt.err (%p495)
  %s498 = scalar_lea.sflag [#allocation2], 15
  %499 = vsyncmov %s498
  %s500 = vpop.sfrf %499
  %p501 = scmp.eq.s32.totalorder %s500, 0
  %p502 = pneg %p501
  %504 = shalt.err (%p502)

</llo_original>
